<compile_context>
chip_gen: v7x
topology: tpu7x:2x2x1
jax: 0.10.0
libtpu: 0.0.40
codegen_flags: <defaults>
</compile_context>

<pallas_src>
import functools

import jax
import jax.numpy as jnp
from jax.experimental import pallas as pl
from jax.experimental.pallas import tpu as pltpu

IN_FEATURES = 384
NUM_CLASSES = 4
EPS = 1e-6

_DEFAULT_TILE_ROWS = 4096             # 4096*384*4 B = 6 MiB/tile; x2 double-buffer = 12 MiB.
_MAX_FUSED_X_BYTES = 8 * 1024 * 1024  # whole-x-in-VMEM threshold (leaves temp headroom on v7x).
_VMEM_LIMIT_BYTES = 48 * 1024 * 1024  # scoped-VMEM limit (v5e's default is only 16 MiB).


def _round_up(n: int, m: int) -> int:
    return ((n + m - 1) // m) * m


# ----------------------------- fused single-read path ----------------------------------------
def _fused_kernel(x_ref, w_ref, b_ref, o_ref, *, compute_dtype):
    # Whole x resident in VMEM: read from HBM exactly once, everything else is on-chip.
    x = x_ref[...].astype(jnp.float32)                          # (B, F)
    n = jnp.float32(x.shape[0])
    mean = jnp.sum(x, axis=0, keepdims=True) / n                # (1, F)
    xc = x - mean
    var = jnp.sum(xc * xc, axis=0, keepdims=True) / n           # biased var (training-mode BN)
    inv_std = jax.lax.rsqrt(var + EPS)                          # (1, F)
    xn = (xc * inv_std).astype(compute_dtype)                   # (B, F)
    w = w_ref[...].astype(compute_dtype)                        # (F, C)
    acc = jnp.dot(xn, w, preferred_element_type=jnp.float32)    # MXU, f32 accumulation
    o_ref[...] = (acc + b_ref[...]).astype(o_ref.dtype)


# ----------------------------- streamed two-pass path ----------------------------------------
def _stats_kernel(x_ref, s1_ref, m2_ref, *, batch: int, tile: int):
    # Per-tile masked sum and *centered* second moment; merged across tiles with Chan's formula.
    i = pl.program_id(0)
    n_valid = jnp.minimum(batch - i * tile, tile)               # >= 1 since grid = cdiv(batch, tile)
    rows = jax.lax.broadcasted_iota(jnp.int32, (tile, 1), 0)
    mask = rows < n_valid                                       # (tile, 1); OOB rows are garbage
    x = jnp.where(mask, x_ref[...].astype(jnp.float32), 0.0)    # (tile, F)
    s1 = jnp.sum(x, axis=0, keepdims=True)                      # (1, F)
    m_tile = s1 / n_valid.astype(jnp.float32)
    xc = jnp.where(mask, x - m_tile, 0.0)
    m2 = jnp.sum(xc * xc, axis=0, keepdims=True)                # (1, F)
    s1_ref[...] = s1[None]
    m2_ref[...] = m2[None]


def _linear_kernel(x_ref, w_ref, b_ref, o_ref, *, compute_dtype):
    # BN already folded into (w, b): logits = x @ W' + b'. One MXU matmul + bias add per tile.
    x = x_ref[...].astype(compute_dtype)
    acc = jnp.dot(x, w_ref[...], preferred_element_type=jnp.float32)   # (TB, C) f32
    o_ref[...] = (acc + b_ref[...]).astype(o_ref.dtype)


# ----------------------------- wrapper --------------------------------------------------------
def classification_head(x, weight_t, bias, *, tile_rows: int = _DEFAULT_TILE_ROWS,
                        compute_dtype=jnp.bfloat16,
                        max_fused_bytes: int = _MAX_FUSED_X_BYTES):
    """BatchNorm1d(affine=False, eps=1e-6) -> Linear(IN_FEATURES, NUM_CLASSES), batch stats.

    x: (B, IN_FEATURES); weight_t: (IN_FEATURES, NUM_CLASSES) (PyTorch weight transposed);
    bias: (NUM_CLASSES,) or (1, NUM_CLASSES). Returns (B, NUM_CLASSES) logits in x.dtype.
    compute_dtype: matmul input dtype (bf16 by default; jnp.float32 for bit-accurate f32).
    Passing x in bfloat16 halves HBM traffic on this bandwidth-bound head.
    """
    B, F = x.shape
    C = weight_t.shape[1]
    compute_dtype = jnp.dtype(compute_dtype if compute_dtype is not None else jnp.float32)
    bias2 = jnp.asarray(bias).reshape(1, C).astype(jnp.float32)
    w32 = weight_t.astype(jnp.float32)

    # ---- Fused path: x fits in VMEM -> single pallas_call, single HBM read of x ----
    if B * F * x.dtype.itemsize <= max_fused_bytes:
        return pl.pallas_call(
            functools.partial(_fused_kernel, compute_dtype=compute_dtype),
            out_shape=jax.ShapeDtypeStruct((B, C), x.dtype),
            compiler_params=pltpu.CompilerParams(vmem_limit_bytes=_VMEM_LIMIT_BYTES),
        )(x, weight_t, bias2)

    # ---- Streamed path (large B): two pipelined passes over x ----
    # Batch tile: multiple of 32 rows (covers f32/bf16/int8 sublane packing), large enough to
    # amortize the ~0.35us/grid-step overhead, capped so there are >= 2 tiles for v7x megacore.
    TB = max(32, min(_round_up(tile_rows, 32), _round_up(pl.cdiv(B, 2), 32)))
    T = pl.cdiv(B, TB)

    # Pass 1: per-tile masked sum + centered second moment (parallel over tiles).
    ps_spec = pl.BlockSpec((1, 1, F), lambda i: (i, 0, 0))
    s1_p, m2_p = pl.pallas_call(
        functools.partial(_stats_kernel, batch=B, tile=TB),
        grid=(T,),
        out_shape=(jax.ShapeDtypeStruct((T, 1, F), jnp.float32),
                   jax.ShapeDtypeStruct((T, 1, F), jnp.float32)),
        in_specs=[pl.BlockSpec((TB, F), lambda i: (i, 0))],
        out_specs=[ps_spec, ps_spec],
        compiler_params=pltpu.CompilerParams(
            dimension_semantics=("parallel",), vmem_limit_bytes=_VMEM_LIMIT_BYTES),
    )(x)

    # Chan (parallel) merge of per-tile moments + fold BN into the Linear (tiny 384-sized math).
    n_i = jnp.clip(B - jnp.arange(T) * TB, 0, TB).astype(jnp.float32)[:, None]   # (T, 1)
    s1 = s1_p[:, 0, :]                                          # (T, F)
    m2 = m2_p[:, 0, :]                                          # (T, F)
    n = jnp.float32(B)
    mean = jnp.sum(s1, axis=0) / n                              # (F,)
    m_i = s1 / n_i                                              # per-tile means
    var = (jnp.sum(m2, axis=0) + jnp.sum(n_i * (m_i - mean) ** 2, axis=0)) / n   # biased
    inv_std = jax.lax.rsqrt(var + EPS)                          # (F,)
    w_fold = (w32 * inv_std[:, None]).astype(compute_dtype)     # (F, C)
    b_fold = bias2 - ((mean * inv_std) @ w32)[None, :]          # (1, C) f32

    # Pass 2: logits = x @ W' + b' (parallel over tiles; ragged tail rows discarded by Pallas).
    out = pl.pallas_call(
        functools.partial(_linear_kernel, compute_dtype=compute_dtype),
        grid=(T,),
        out_shape=jax.ShapeDtypeStruct((B, C), x.dtype),
        in_specs=[
            pl.BlockSpec((TB, F), lambda i: (i, 0)),
            pl.BlockSpec((F, C), lambda i: (0, 0)),             # resident across all tiles
            pl.BlockSpec((1, C), lambda i: (0, 0)),
        ],
        out_specs=pl.BlockSpec((TB, C), lambda i: (i, 0)),
        compiler_params=pltpu.CompilerParams(
            dimension_semantics=("parallel",), vmem_limit_bytes=_VMEM_LIMIT_BYTES),
    )(x, w_fold, b_fold)
    return out


# ----------------------------- reference & tests ----------------------------------------------
def _reference(x, weight_t, bias):
    x = x.astype(jnp.float32)
    mean = jnp.mean(x, axis=0, keepdims=True)
    var = jnp.mean((x - mean) ** 2, axis=0, keepdims=True)
    x_norm = (x - mean) / jnp.sqrt(var + EPS)
    return x_norm @ weight_t.astype(jnp.float32) + jnp.asarray(bias).reshape(1, -1).astype(jnp.float32)


if __name__ == "__main__":
    key = jax.random.PRNGKey(0)
    kx, kw, kb, kx2 = jax.random.split(key, 4)

    # Deterministic synthetic Linear parameters (PyTorch weight shape is (C, F); pass W.T).
    bound = 1.0 / (IN_FEATURES ** 0.5)
    weight = jax.random.uniform(kw, (NUM_CLASSES, IN_FEATURES),
                                minval=-bound, maxval=bound, dtype=jnp.float32)
    bias = jax.random.uniform(kb, (NUM_CLASSES,),
                              minval=-bound, maxval=bound, dtype=jnp.float32)
    weight_t = weight.T  # (IN_FEATURES, NUM_CLASSES)

    # Test 1: small batch -> fused single-read path, exact f32 matmul.
    B = 8
    x = jax.random.normal(kx, (B, IN_FEATURES), dtype=jnp.float32)
    ref = _reference(x, weight_t, bias)
    out = jax.block_until_ready(classification_head(x, weight_t, bias, compute_dtype=jnp.float32))
    assert out.shape == (B, NUM_CLASSES)
    assert jnp.allclose(out, ref, atol=1e-4, rtol=1e-4)

    # Test 2: fused path with the default bf16 matmul (looser tolerance vs f32 reference).
    out_bf = jax.block_until_ready(classification_head(x, weight_t, bias))
    assert out_bf.shape == (B, NUM_CLASSES)
    assert jnp.allclose(out_bf, ref, atol=2e-2, rtol=2e-2)

    # Test 3: ragged multi-tile streamed two-pass path (forced), exact f32 matmul.
    B2 = 40
    x2 = jax.random.normal(kx2, (B2, IN_FEATURES), dtype=jnp.float32)
    ref2 = _reference(x2, weight_t, bias)
    out2 = jax.block_until_ready(classification_head(
        x2, weight_t, bias, tile_rows=16, max_fused_bytes=0, compute_dtype=jnp.float32))
    assert out2.shape == (B2, NUM_CLASSES)
    assert jnp.allclose(out2, ref2, atol=1e-4, rtol=1e-4)

    # Test 4: streamed path with the default bf16 matmul.
    out2_bf = jax.block_until_ready(classification_head(
        x2, weight_t, bias, tile_rows=16, max_fused_bytes=0))
    assert out2_bf.shape == (B2, NUM_CLASSES)
    assert jnp.allclose(out2_bf, ref2, atol=2e-2, rtol=2e-2)

    print("KERNEL_OK")
</pallas_src>

<mosaic_0001>
module attributes {stable_mosaic.version = 11 : i64} {
  func.func @_fused_kernel(%arg0: memref<8x384xf32, #tpu.memory_space<vmem>>, %arg1: memref<384x4xf32, #tpu.memory_space<vmem>>, %arg2: memref<1x4xf32, #tpu.memory_space<vmem>>, %arg3: memref<8x4xf32, #tpu.memory_space<vmem>>) attributes {dimension_semantics = [], scalar_prefetch = 0 : i64, scratch_operands = 0 : i64, tpu.core_type = #tpu.core_type<tc>} {
    %c0 = arith.constant 0 : index
    %c0_0 = arith.constant 0 : index
    %0 = vector.load %arg0[%c0, %c0_0] : memref<8x384xf32, #tpu.memory_space<vmem>>, vector<8x384xf32>
    %cst = arith.constant dense<0.000000e+00> : vector<384xf32>
    %1 = vector.multi_reduction <add>, %0, %cst [0] : vector<8x384xf32> to vector<384xf32>
    %2 = vector.shape_cast %1 : vector<384xf32> to vector<1x384xf32>
    %cst_1 = arith.constant 8.000000e+00 : f32
    %3 = vector.broadcast %cst_1 : f32 to vector<1x384xf32>
    %4 = arith.divf %2, %3 : vector<1x384xf32>
    %5 = vector.broadcast %4 : vector<1x384xf32> to vector<8x384xf32>
    %6 = arith.subf %0, %5 : vector<8x384xf32>
    %7 = arith.mulf %6, %6 : vector<8x384xf32>
    %cst_2 = arith.constant dense<0.000000e+00> : vector<384xf32>
    %8 = vector.multi_reduction <add>, %7, %cst_2 [0] : vector<8x384xf32> to vector<384xf32>
    %9 = vector.shape_cast %8 : vector<384xf32> to vector<1x384xf32>
    %cst_3 = arith.constant 8.000000e+00 : f32
    %10 = vector.broadcast %cst_3 : f32 to vector<1x384xf32>
    %11 = arith.divf %9, %10 : vector<1x384xf32>
    %cst_4 = arith.constant 9.99999997E-7 : f32
    %12 = vector.broadcast %cst_4 : f32 to vector<1x384xf32>
    %13 = arith.addf %11, %12 : vector<1x384xf32>
    %14 = math.rsqrt %13 : vector<1x384xf32>
    %15 = vector.broadcast %14 : vector<1x384xf32> to vector<8x384xf32>
    %16 = arith.mulf %6, %15 : vector<8x384xf32>
    %c0_5 = arith.constant 0 : index
    %c0_6 = arith.constant 0 : index
    %17 = vector.load %arg1[%c0_5, %c0_6] : memref<384x4xf32, #tpu.memory_space<vmem>>, vector<384x4xf32>
    %cst_7 = arith.constant dense<0.000000e+00> : vector<8x4xf32>
    %18 = tpu.matmul %16, %17, %cst_7 {dimension_numbers = #tpu.dot_dimension_numbers<[1], [0], [0], [1], [0, 0, 1, 1], [], []>} : vector<8x384xf32>, vector<384x4xf32>, vector<8x4xf32> -> vector<8x4xf32>
    %c0_8 = arith.constant 0 : index
    %c0_9 = arith.constant 0 : index
    %19 = vector.load %arg2[%c0_8, %c0_9] : memref<1x4xf32, #tpu.memory_space<vmem>>, vector<1x4xf32>
    %20 = vector.broadcast %19 : vector<1x4xf32> to vector<8x4xf32>
    %21 = arith.addf %18, %20 : vector<8x4xf32>
    %c0_10 = arith.constant 0 : index
    %c0_11 = arith.constant 0 : index
    %22 = vector.load %arg3[%c0_10, %c0_11] : memref<8x4xf32, #tpu.memory_space<vmem>>, vector<8x4xf32>
    tpu.vector_store %arg3[%c0_10, %c0_11], %21 {strides = array<i32>} : memref<8x4xf32, #tpu.memory_space<vmem>>, vector<8x4xf32>,
    return
  }
}

</mosaic_0001>

<llo_original>
// kernel: tpu_custom_call.1
$region0: #{tpu_custom_call.1}
  #allocation0 [shape = 'u32[]', space=smem, size = 0x4, offset = 0x4, fixed_abs, tag = 'smem constant byte address 0x4 - core index']
  #allocation1 [shape = 'u32[144,128]{1,0:T(1,128)}', space=vmem, size = 0x12000, scoped, tag = 'internal scratch']
  %s0 = inlined_call_operand.vmem [shape: f32[8,384], index: 0, kind: input, shape index: {}]
  %s1 = inlined_call_operand.vmem [shape: f32[384,4], index: 1, kind: input, shape index: {}]
  %s2 = inlined_call_operand.vmem [shape: f32[1,4], index: 2, kind: input, shape index: {}]
  %s3 = inlined_call_operand.vmem [shape: f32[8,4], index: 3, kind: output, shape index: {}]
  %s4 = sld [smem:[#allocation0]]
  $region22: #{tpu_custom_call.1} parent=0
    _
  %s6 = ssub.s32 1, %s4
  %s7 = scalar_select 0, %s6, %s4
  // Predicated region
  $region2: #{tpu_custom_call.1} parent=0 // pred_check
    _
  $region3: #{tpu_custom_call.1} parent=0 // pred_check_branch
    %9 = sbr.rel (0) target = $region5
  $region4: #{tpu_custom_call.1} parent=0 // pred_region
    _
  $region5: #{tpu_custom_call.1} parent=0 // pred_fallthru
    _
  // Predicated region
  $region6: #{tpu_custom_call.1} parent=0 // pred_check
    _
  $region7: #{tpu_custom_call.1} parent=0 // pred_check_branch
    %11 = sbr.rel (0) target = $region9
  $region8: #{tpu_custom_call.1} parent=0 // pred_region
    _
  $region9: #{tpu_custom_call.1} parent=0 // pred_fallthru
    _
  // Predicated region
  $region10: #{tpu_custom_call.1} parent=0 // pred_check
    _
  $region11: #{tpu_custom_call.1} parent=0 // pred_check_branch
    %13 = sbr.rel (0) target = $region13
  $region12: #{tpu_custom_call.1} parent=0 // pred_region
    _
  $region13: #{tpu_custom_call.1} parent=0 // pred_fallthru
    _
  %v14 = vld [vmem:[%s0] sm:$0xff]
  %v15 = vld [vmem:[%s0 + $0x8] sm:$0xff]
  %v16 = vld [vmem:[%s0 + $0x10] sm:$0xff]
  %v17 = vrot.slane %v14, 4
  %v18 = vadd.f32 %v14, %v17
  %v19 = vrot.slane %v18, 2
  %v20 = vadd.f32 %v18, %v19
  %v21 = vrot.slane %v20, 1
  %v22 = vadd.f32 %v20, %v21
  %v23 = vrot.slane %v15, 4
  %v24 = vadd.f32 %v15, %v23
  %v25 = vrot.slane %v24, 2
  %v26 = vadd.f32 %v24, %v25
  %v27 = vrot.slane %v26, 1
  %v28 = vadd.f32 %v26, %v27
  %v29 = vrot.slane %v16, 4
  %v30 = vadd.f32 %v16, %v29
  %v31 = vrot.slane %v30, 2
  %v32 = vadd.f32 %v30, %v31
  %v33 = vrot.slane %v32, 1
  %v34 = vadd.f32 %v32, %v33
  %v35 = vrcp.pop 8.0
  %v36 = vmul.f32 %v22, %v35
  %v37 = vmul.f32 %v28, %v35
  %v38 = vmul.f32 %v34, %v35
  %v39 = vsub.f32 %v14, %v36
  %v40 = vsub.f32 %v15, %v37
  %v41 = vsub.f32 %v16, %v38
  %v42 = vmul.f32 %v39, %v39
  %v43 = vmul.f32 %v40, %v40
  %v44 = vmul.f32 %v41, %v41
  %v45 = vrot.slane %v42, 4
  %v46 = vadd.f32 %v42, %v45
  %v47 = vrot.slane %v46, 2
  %v48 = vadd.f32 %v46, %v47
  %v49 = vrot.slane %v48, 1
  %v50 = vadd.f32 %v48, %v49
  %v51 = vrot.slane %v43, 4
  %v52 = vadd.f32 %v43, %v51
  %v53 = vrot.slane %v52, 2
  %v54 = vadd.f32 %v52, %v53
  %v55 = vrot.slane %v54, 1
  %v56 = vadd.f32 %v54, %v55
  %v57 = vrot.slane %v44, 4
  %v58 = vadd.f32 %v44, %v57
  %v59 = vrot.slane %v58, 2
  %v60 = vadd.f32 %v58, %v59
  %v61 = vrot.slane %v60, 1
  %v62 = vadd.f32 %v60, %v61
  %v63 = vmul.f32 %v50, %v35
  %v64 = vmul.f32 %v56, %v35
  %v65 = vmul.f32 %v62, %v35
  %v66 = vadd.f32 %v63, 1e-06
  %v67 = vadd.f32 %v64, 1e-06
  %v68 = vadd.f32 %v65, 1e-06
  %v69 = vrsqrt.pop %v66
  %v70 = vrsqrt.pop %v67
  %v71 = vrsqrt.pop %v68
  %v72 = vmul.f32 %v39, %v69
  %v73 = vmul.f32 %v40, %v70
  %v74 = vmul.f32 %v41, %v71
  %v75 = vld [vmem:[%s1] sm:$0xff]
  %v76 = vld [vmem:[%s1 + $0x8] sm:$0xff]
  %v77 = vld [vmem:[%s1 + $0x10] sm:$0xff]
  %v78 = vld [vmem:[%s1 + $0x18] sm:$0xff]
  %v79 = vld [vmem:[%s1 + $0x20] sm:$0xff]
  %v80 = vld [vmem:[%s1 + $0x28] sm:$0xff]
  %v81 = vld [vmem:[%s1 + $0x30] sm:$0xff]
  %v82 = vld [vmem:[%s1 + $0x38] sm:$0xff]
  %v83 = vld [vmem:[%s1 + $0x40] sm:$0xff]
  %v84 = vld [vmem:[%s1 + $0x48] sm:$0xff]
  %v85 = vld [vmem:[%s1 + $0x50] sm:$0xff]
  %v86 = vld [vmem:[%s1 + $0x58] sm:$0xff]
  %v87 = vld [vmem:[%s1 + $0x60] sm:$0xff]
  %v88 = vld [vmem:[%s1 + $0x68] sm:$0xff]
  %v89 = vld [vmem:[%s1 + $0x70] sm:$0xff]
  %v90 = vld [vmem:[%s1 + $0x78] sm:$0xff]
  %v91 = vld [vmem:[%s1 + $0x80] sm:$0xff]
  %v92 = vld [vmem:[%s1 + $0x88] sm:$0xff]
  %v93 = vld [vmem:[%s1 + $0x90] sm:$0xff]
  %v94 = vld [vmem:[%s1 + $0x98] sm:$0xff]
  %v95 = vld [vmem:[%s1 + $0xa0] sm:$0xff]
  %v96 = vld [vmem:[%s1 + $0xa8] sm:$0xff]
  %v97 = vld [vmem:[%s1 + $0xb0] sm:$0xff]
  %v98 = vld [vmem:[%s1 + $0xb8] sm:$0xff]
  %v99 = vld [vmem:[%s1 + $0xc0] sm:$0xff]
  %v100 = vld [vmem:[%s1 + $0xc8] sm:$0xff]
  %v101 = vld [vmem:[%s1 + $0xd0] sm:$0xff]
  %v102 = vld [vmem:[%s1 + $0xd8] sm:$0xff]
  %v103 = vld [vmem:[%s1 + $0xe0] sm:$0xff]
  %v104 = vld [vmem:[%s1 + $0xe8] sm:$0xff]
  %v105 = vld [vmem:[%s1 + $0xf0] sm:$0xff]
  %v106 = vld [vmem:[%s1 + $0xf8] sm:$0xff]
  %v107 = vld [vmem:[%s1 + $0x100] sm:$0xff]
  %v108 = vld [vmem:[%s1 + $0x108] sm:$0xff]
  %v109 = vld [vmem:[%s1 + $0x110] sm:$0xff]
  %v110 = vld [vmem:[%s1 + $0x118] sm:$0xff]
  %v111 = vld [vmem:[%s1 + $0x120] sm:$0xff]
  %v112 = vld [vmem:[%s1 + $0x128] sm:$0xff]
  %v113 = vld [vmem:[%s1 + $0x130] sm:$0xff]
  %v114 = vld [vmem:[%s1 + $0x138] sm:$0xff]
  %v115 = vld [vmem:[%s1 + $0x140] sm:$0xff]
  %v116 = vld [vmem:[%s1 + $0x148] sm:$0xff]
  %v117 = vld [vmem:[%s1 + $0x150] sm:$0xff]
  %v118 = vld [vmem:[%s1 + $0x158] sm:$0xff]
  %v119 = vld [vmem:[%s1 + $0x160] sm:$0xff]
  %v120 = vld [vmem:[%s1 + $0x168] sm:$0xff]
  %v121 = vld [vmem:[%s1 + $0x170] sm:$0xff]
  %v122 = vld [vmem:[%s1 + $0x178] sm:$0xff]
  %v123 = vld [vmem:[%s2] sm:$0x1]
  %v125 = vlaneseq
  %v126 = vshrl.u32 %v125, 7
  %v127 = vsub.s32 0, %v126
  %v128 = vrot.slane %v123, %v127
  %130 = vmatprep.subr.mxu0 0.0
  %131 = vmatpush1.msra.mxu0 %v75
  %132 = vmatprep.subr.mxu0 0.0
  %133 = vmatpush1.msra.mxu0 %v76
  %134 = vmatprep.subr.mxu0 0.0
  %135 = vmatpush1.msra.mxu0 %v77
  %136 = vmatprep.subr.mxu0 0.0
  %137 = vmatpush1.msra.mxu0 %v78
  %138 = vmatprep.subr.mxu0 0.0
  %139 = vmatpush1.msra.mxu0 %v79
  %140 = vmatprep.subr.mxu0 0.0
  %141 = vmatpush1.msra.mxu0 %v80
  %142 = vmatprep.subr.mxu0 0.0
  %143 = vmatpush1.msra.mxu0 %v81
  %144 = vmatprep.subr.mxu0 0.0
  %145 = vmatpush1.msra.mxu0 %v82
  %146 = vmatprep.subr.mxu0 0.0
  %147 = vmatpush1.msra.mxu0 %v83
  %148 = vmatprep.subr.mxu0 0.0
  %149 = vmatpush1.msra.mxu0 %v84
  %150 = vmatprep.subr.mxu0 0.0
  %151 = vmatpush1.msra.mxu0 %v85
  %152 = vmatprep.subr.mxu0 0.0
  %153 = vmatpush1.msra.mxu0 %v86
  %154 = vmatprep.subr.mxu0 0.0
  %155 = vmatpush1.msra.mxu0 %v87
  %156 = vmatprep.subr.mxu0 0.0
  %157 = vmatpush1.msra.mxu0 %v88
  %158 = vmatprep.subr.mxu0 0.0
  %159 = vmatpush1.msra.mxu0 %v89
  %160 = vmatprep.subr.mxu0 0.0
  %161 = vmatpush1.msra.mxu0 %v90
  %162 = vmatprep.subr.mxu0 0.0
  %163 = vmatpush1.msra.mxu0 %v91
  %164 = vmatprep.subr.mxu0 0.0
  %165 = vmatpush1.msra.mxu0 %v92
  %166 = vmatprep.subr.mxu0 0.0
  %167 = vmatpush1.msra.mxu0 %v93
  %168 = vmatprep.subr.mxu0 0.0
  %169 = vmatpush1.msra.mxu0 %v94
  %170 = vmatprep.subr.mxu0 0.0
  %171 = vmatpush1.msra.mxu0 %v95
  %172 = vmatprep.subr.mxu0 0.0
  %173 = vmatpush1.msra.mxu0 %v96
  %174 = vmatprep.subr.mxu0 0.0
  %175 = vmatpush1.msra.mxu0 %v97
  %176 = vmatprep.subr.mxu0 0.0
  %177 = vmatpush1.msra.mxu0 %v98
  %178 = vmatprep.subr.mxu0 0.0
  %179 = vmatpush1.msra.mxu0 %v99
  %180 = vmatprep.subr.mxu0 0.0
  %181 = vmatpush1.msra.mxu0 %v100
  %182 = vmatprep.subr.mxu0 0.0
  %183 = vmatpush1.msra.mxu0 %v101
  %184 = vmatprep.subr.mxu0 0.0
  %185 = vmatpush1.msra.mxu0 %v102
  %186 = vmatprep.subr.mxu0 0.0
  %187 = vmatpush1.msra.mxu0 %v103
  %188 = vmatprep.subr.mxu0 0.0
  %189 = vmatpush1.msra.mxu0 %v104
  %190 = vmatprep.subr.mxu0 0.0
  %191 = vmatpush1.msra.mxu0 %v105
  %192 = vmatprep.subr.mxu0 0.0
  %193 = vmatpush1.msra.mxu0 %v106
  %194 = vmatprep.mubr.f32.mxu0 %v73
  %195 = vmatmul.mubr.f32.gmra.mrb[0].mxu0 %v72
  %v196 = vpop.f32.mrb[0].mxu0
  %v197 = vadd.f32 %v128, %v196
  %v198 = vpop.f32.mrb[0].mxu0
  %199 = vdwg.mxu0
  %200 = vmatprep.subr.mxu0 0.0
  %201 = vmatpush1.msra.mxu0 %v107
  %202 = vmatprep.subr.mxu0 0.0
  %203 = vmatpush1.msra.mxu0 %v108
  %204 = vmatprep.subr.mxu0 0.0
  %205 = vmatpush1.msra.mxu0 %v109
  %206 = vmatprep.subr.mxu0 0.0
  %207 = vmatpush1.msra.mxu0 %v110
  %208 = vmatprep.subr.mxu0 0.0
  %209 = vmatpush1.msra.mxu0 %v111
  %210 = vmatprep.subr.mxu0 0.0
  %211 = vmatpush1.msra.mxu0 %v112
  %212 = vmatprep.subr.mxu0 0.0
  %213 = vmatpush1.msra.mxu0 %v113
  %214 = vmatprep.subr.mxu0 0.0
  %215 = vmatpush1.msra.mxu0 %v114
  %216 = vmatprep.subr.mxu0 0.0
  %217 = vmatpush1.msra.mxu0 %v115
  %218 = vmatprep.subr.mxu0 0.0
  %219 = vmatpush1.msra.mxu0 %v116
  %220 = vmatprep.subr.mxu0 0.0
  %221 = vmatpush1.msra.mxu0 %v117
  %222 = vmatprep.subr.mxu0 0.0
  %223 = vmatpush1.msra.mxu0 %v118
  %224 = vmatprep.subr.mxu0 0.0
  %225 = vmatpush1.msra.mxu0 %v119
  %226 = vmatprep.subr.mxu0 0.0
  %227 = vmatpush1.msra.mxu0 %v120
  %228 = vmatprep.subr.mxu0 0.0
  %229 = vmatpush1.msra.mxu0 %v121
  %230 = vmatprep.subr.mxu0 0.0
  %231 = vmatpush1.msra.mxu0 %v122
  %232 = vmatprep.subr.mxu0 0.0
  %233 = vmatpush1.msra.mxu0 0.0
  %234 = vmatprep.subr.mxu0 0.0
  %235 = vmatpush1.msra.mxu0 0.0
  %236 = vmatprep.subr.mxu0 0.0
  %237 = vmatpush1.msra.mxu0 0.0
  %238 = vmatprep.subr.mxu0 0.0
  %239 = vmatpush1.msra.mxu0 0.0
  %240 = vmatprep.subr.mxu0 0.0
  %241 = vmatpush1.msra.mxu0 0.0
  %242 = vmatprep.subr.mxu0 0.0
  %243 = vmatpush1.msra.mxu0 0.0
  %244 = vmatprep.subr.mxu0 0.0
  %245 = vmatpush1.msra.mxu0 0.0
  %246 = vmatprep.subr.mxu0 0.0
  %247 = vmatpush1.msra.mxu0 0.0
  %248 = vmatprep.subr.mxu0 0.0
  %249 = vmatpush1.msra.mxu0 0.0
  %250 = vmatprep.subr.mxu0 0.0
  %251 = vmatpush1.msra.mxu0 0.0
  %252 = vmatprep.subr.mxu0 0.0
  %253 = vmatpush1.msra.mxu0 0.0
  %254 = vmatprep.subr.mxu0 0.0
  %255 = vmatpush1.msra.mxu0 0.0
  %256 = vmatprep.subr.mxu0 0.0
  %257 = vmatpush1.msra.mxu0 0.0
  %258 = vmatprep.subr.mxu0 0.0
  %259 = vmatpush1.msra.mxu0 0.0
  %260 = vmatprep.subr.mxu0 0.0
  %261 = vmatpush1.msra.mxu0 0.0
  %262 = vmatprep.subr.mxu0 0.0
  %263 = vmatpush1.msra.mxu0 0.0
  %264 = vmatprep.mubr.f32.mxu0 0.0
  %265 = vmatmul.mubr.f32.gmra.mrb[0].mxu0 %v74
  %v266 = vpop.f32.mrb[0].mxu0
  %v267 = vadd.f32 %v197, %v266
  %v268 = vpop.f32.mrb[0].mxu0
  %269 = vdwg.mxu0
  %vm270 = vcmask 31744
  %271 = vst.msk [vmem:[%s3] sm:$0xff] %vm270, %v267
  // Predicated region
  $region14: #{tpu_custom_call.1} parent=0 // pred_check
    _
  $region15: #{tpu_custom_call.1} parent=0 // pred_check_branch
    %273 = sbr.rel (0) target = $region17
  $region16: #{tpu_custom_call.1} parent=0 // pred_region
    _
  $region17: #{tpu_custom_call.1} parent=0 // pred_fallthru
    _
  // Predicated region
  $region18: #{tpu_custom_call.1} parent=0 // pred_check
    _
  $region19: #{tpu_custom_call.1} parent=0 // pred_check_branch
    %275 = sbr.rel (0) target = $region21
  $region20: #{tpu_custom_call.1} parent=0 // pred_region
    _
  $region21: #{tpu_custom_call.1} parent=0 // pred_fallthru
    _

</llo_original>
